<compile_context>
chip_gen: v7x
topology: tpu7x:2x2x1
jax: 0.10.0
libtpu: 0.0.40
codegen_flags: <defaults>
</compile_context>

<pallas_src>
import jax
import jax.numpy as jnp
from jax.experimental import pallas as pl
from jax.experimental.pallas import tpu as pltpu

LANE = 128
SUBLANE = 8
TB_MAX = 2048   # batch-tile upper bound (swept range 1024-2048 recommended)


def _round_up(n, m):
    return ((n + m - 1) // m) * m


# -----------------------------------------------------------------------------
# Kernel
# -----------------------------------------------------------------------------
def _make_fused_mlp_kernel(layer_meta):
    """layer_meta: tuple of (w_row_off, w_rows, b_row_off, out_cols), static ints."""
    n_layers = len(layer_meta)

    def kernel(state_ref, params_ref, out_ref):
        h = state_ref[...]                                    # (TB, state_dim) f32
        for li, (w_off, w_rows, b_off, out_cols) in enumerate(layer_meta):
            w = params_ref[w_off:w_off + w_rows, :out_cols]   # static ref slices
            b = params_ref[b_off:b_off + 1, :out_cols]
            h = jnp.dot(h, w, preferred_element_type=jnp.float32) + b
            if li < n_layers - 1:
                h = jnp.maximum(h, 0.0)                       # ReLU
        out_ref[...] = h.astype(out_ref.dtype)                # lane-dense store

    return kernel


# -----------------------------------------------------------------------------
# Parameter packing: merge actor+critic, lane-pad, pack into one slab
# -----------------------------------------------------------------------------
def pack_ppo_params(actor_params, critic_params):
    """Build one (rows, 128k) f32 slab holding the merged block-diagonal MLP.

    Layer 0:   [aw0 | cw0]                       (state_dim, 2*h0)
    Layer i>0: [[aw_i, 0], [0, cw_i]]            (2*h_{i-1}, 2*h_i) (last: a_dim+1)
    Each layer's columns are zero-padded to a multiple of 128 so every matmul
    and the final store are lane-dense; padded rows/cols are zero, so the math
    is exactly the original actor/critic computation.
    """
    assert len(actor_params) == len(critic_params)
    L = len(actor_params)

    merged = []
    for i in range(L):
        aw, ab = actor_params[i]
        cw, cb = critic_params[i]
        if i == 0:
            w = jnp.concatenate([aw, cw], axis=1)
        else:
            top = jnp.concatenate(
                [aw, jnp.zeros((aw.shape[0], cw.shape[1]), jnp.float32)], axis=1)
            bot = jnp.concatenate(
                [jnp.zeros((cw.shape[0], aw.shape[1]), jnp.float32), cw], axis=1)
            w = jnp.concatenate([top, bot], axis=0)
        b = jnp.concatenate([ab, cb], axis=1)
        merged.append((w, b))

    out_pad = [_round_up(w.shape[1], LANE) for (w, _) in merged]
    slab_w = max(out_pad)

    segments = []
    layer_meta = []
    row = 0
    for i, (w, b) in enumerate(merged):
        in_real = w.shape[0]
        # rows consumed by the dot: raw state_dim for layer 0, padded width after
        in_rows = in_real if i == 0 else out_pad[i - 1]
        out_cols = out_pad[i]
        w_seg_rows = _round_up(in_rows, SUBLANE)

        w_seg = jnp.zeros((w_seg_rows, slab_w), jnp.float32)
        w_seg = w_seg.at[:in_real, :w.shape[1]].set(w)
        b_seg = jnp.zeros((SUBLANE, slab_w), jnp.float32)
        b_seg = b_seg.at[0, :b.shape[1]].set(b[0])

        layer_meta.append((row, in_rows, row + w_seg_rows, out_cols))
        row += w_seg_rows + SUBLANE
        segments.extend([w_seg, b_seg])

    slab = jnp.concatenate(segments, axis=0)
    return slab, tuple(layer_meta), out_pad[-1]


# -----------------------------------------------------------------------------
# Forward wrapper
# -----------------------------------------------------------------------------
def ppo_forward(state, slab, layer_meta, action_dim, out_dtype=jnp.bfloat16):
    """Returns (action_mean, state_value) like PPONetwork.forward.

    Compute is f32; stored output dtype is `out_dtype` (bf16 by default to
    halve the dominant HBM writeback; pass jnp.float32 for exact parity).
    """
    batch, state_dim = state.shape
    out_w = layer_meta[-1][3]

    # Batch tiling (no host-side padding; Pallas masks the ragged last block):
    #   * large tiles to amortize the ~0.35 us per-grid-step overhead,
    #   * but keep >=2 blocks whenever batch allows (v7x has 2 TensorCores),
    #   * TB is a multiple of 8 sublanes (or equals the full batch when tiny).
    if batch >= 2 * SUBLANE:
        TB = min(TB_MAX, _round_up(pl.cdiv(batch, 2), SUBLANE))
    else:
        TB = batch
    grid = (pl.cdiv(batch, TB),)

    # Explicit VMEM limit only if the working set gets large (v5e scoped
    # default is 16 MiB); at TB<=2048 this never triggers (~2.5 MiB total).
    out_itemsize = jnp.dtype(out_dtype).itemsize
    vmem_needed = (slab.size * 4
                   + 2 * TB * state_dim * 4
                   + 2 * TB * out_w * out_itemsize)
    vmem_limit = int(2 * vmem_needed) if vmem_needed > 12 * 2**20 else None

    kernel = _make_fused_mlp_kernel(layer_meta)
    out = pl.pallas_call(
        kernel,
        out_shape=jax.ShapeDtypeStruct((batch, out_w), out_dtype),
        grid=grid,
        in_specs=[
            pl.BlockSpec((TB, state_dim), lambda i: (i, 0)),
            # Constant block index -> weight slab is DMA'd once and stays
            # VMEM-resident across grid steps.
            pl.BlockSpec(slab.shape, lambda i: (0, 0)),
        ],
        out_specs=pl.BlockSpec((TB, out_w), lambda i: (i, 0)),
        compiler_params=pltpu.CompilerParams(
            dimension_semantics=("parallel",),
            vmem_limit_bytes=vmem_limit),
    )(state, slab)

    action_mean = out[:, :action_dim]
    state_value = out[:, action_dim:action_dim + 1]
    return action_mean, state_value


# -----------------------------------------------------------------------------
# Init (mimics PyTorch nn.Linear default init), weights stored (in_dim, out_dim)
# -----------------------------------------------------------------------------
def init_linear(key, in_dim, out_dim):
    kw, kb = jax.random.split(key)
    bound = 1.0 / jnp.sqrt(jnp.float32(in_dim))
    w = jax.random.uniform(kw, (in_dim, out_dim), jnp.float32, -bound, bound)
    b = jax.random.uniform(kb, (1, out_dim), jnp.float32, -bound, bound)
    return w, b


def init_ppo_params(key, state_dim, action_dim, hidden_dims):
    dims_actor = [state_dim] + hidden_dims + [action_dim]
    dims_critic = [state_dim] + hidden_dims + [1]
    keys = jax.random.split(key, len(dims_actor) - 1 + len(dims_critic) - 1 + 1)
    actor_params, critic_params = [], []
    k = 0
    for i in range(len(dims_actor) - 1):
        actor_params.append(init_linear(keys[k], dims_actor[i], dims_actor[i + 1]))
        k += 1
    for i in range(len(dims_critic) - 1):
        critic_params.append(init_linear(keys[k], dims_critic[i], dims_critic[i + 1]))
        k += 1
    log_std = jnp.zeros((action_dim,), jnp.float32)
    # TODO(synk): get_action / evaluate_actions (Normal sampling, log_prob,
    # entropy via exp(log_std) + pltpu.prng_*) are not kernelized; only
    # forward() is implemented as a Pallas kernel.
    return actor_params, critic_params, log_std


# -----------------------------------------------------------------------------
# Pure-JAX reference (unmerged params) for correctness check
# -----------------------------------------------------------------------------
def reference_forward(state, actor_params, critic_params):
    x = state
    for (w, b) in actor_params[:-1]:
        x = jnp.maximum(x @ w + b, 0.0)
    action_mean = x @ actor_params[-1][0] + actor_params[-1][1]
    x = state
    for (w, b) in critic_params[:-1]:
        x = jnp.maximum(x @ w + b, 0.0)
    value = x @ critic_params[-1][0] + critic_params[-1][1]
    return action_mean, value


if __name__ == "__main__":
    key = jax.random.PRNGKey(0)
    k_state, k_params, k_state2 = jax.random.split(key, 3)

    batch = 8
    state_dim = 16
    hidden_dims = [32, 32]
    action_dim = 8

    state = jax.random.normal(k_state, (batch, state_dim), jnp.float32)
    actor_params, critic_params, log_std = init_ppo_params(
        k_params, state_dim, action_dim, hidden_dims)

    # One-time parameter packing (cached alongside the params in real use).
    slab, layer_meta, _ = pack_ppo_params(actor_params, critic_params)

    # --- exact-parity path (f32 store), tight tolerance -----------------------
    am32, sv32 = ppo_forward(state, slab, layer_meta, action_dim,
                             out_dtype=jnp.float32)
    jax.block_until_ready((am32, sv32))
    ref_mean, ref_value = reference_forward(state, actor_params, critic_params)
    assert am32.shape == (batch, action_dim)
    assert sv32.shape == (batch, 1)
    assert jnp.allclose(am32, ref_mean, atol=1e-5, rtol=1e-5)
    assert jnp.allclose(sv32, ref_value, atol=1e-5, rtol=1e-5)

    # --- default path (f32 compute, bf16 store), bf16 tolerance ---------------
    am_bf, sv_bf = ppo_forward(state, slab, layer_meta, action_dim)
    jax.block_until_ready((am_bf, sv_bf))
    assert jnp.allclose(am_bf.astype(jnp.float32), ref_mean, atol=2e-2, rtol=2e-2)
    assert jnp.allclose(sv_bf.astype(jnp.float32), ref_value, atol=2e-2, rtol=2e-2)

    # --- ragged-last-block path (batch not a multiple of the tile) ------------
    batch2 = 100
    state2 = jax.random.normal(k_state2, (batch2, state_dim), jnp.float32)
    am2, sv2 = ppo_forward(state2, slab, layer_meta, action_dim,
                           out_dtype=jnp.float32)
    jax.block_until_ready((am2, sv2))
    ref_mean2, ref_value2 = reference_forward(state2, actor_params, critic_params)
    assert am2.shape == (batch2, action_dim)
    assert sv2.shape == (batch2, 1)
    assert jnp.allclose(am2, ref_mean2, atol=1e-5, rtol=1e-5)
    assert jnp.allclose(sv2, ref_value2, atol=1e-5, rtol=1e-5)

    print("KERNEL_OK")
</pallas_src>

<mosaic_0001>
module attributes {stable_mosaic.version = 11 : i64} {
  func.func @kernel(%arg0: i32, %arg1: memref<8x16xf32, #tpu.memory_space<vmem>>, %arg2: memref<296x128xf32, #tpu.memory_space<vmem>>, %arg3: memref<8x128xf32, #tpu.memory_space<vmem>>) attributes {dimension_semantics = [#tpu.dimension_semantics<parallel>], iteration_bounds = array<i64: 1>, scalar_prefetch = 0 : i64, scratch_operands = 0 : i64, tpu.core_type = #tpu.core_type<tc>, window_params = [{transform_indices = @transform_0, window_bounds = array<i64: 8, 16>}, {pipeline_mode = #tpu.pipeline_mode<synchronous>, transform_indices = @transform_1, window_bounds = array<i64: 296, 128>}, {transform_indices = @transform_2, window_bounds = array<i64: 8, 128>}]} {
    %c0 = arith.constant 0 : index
    %c0_0 = arith.constant 0 : index
    %0 = vector.load %arg1[%c0, %c0_0] : memref<8x16xf32, #tpu.memory_space<vmem>>, vector<8x16xf32>
    %c0_1 = arith.constant 0 : index
    %c0_2 = arith.constant 0 : index
    %1 = vector.load %arg2[%c0_1, %c0_2] : memref<296x128xf32, #tpu.memory_space<vmem>>, vector<16x128xf32>
    %c16 = arith.constant 16 : index
    %c0_3 = arith.constant 0 : index
    %2 = vector.load %arg2[%c16, %c0_3] : memref<296x128xf32, #tpu.memory_space<vmem>>, vector<1x128xf32>
    %cst = arith.constant dense<0.000000e+00> : vector<8x128xf32>
    %3 = tpu.matmul %0, %1, %cst {dimension_numbers = #tpu.dot_dimension_numbers<[1], [0], [0], [1], [0, 0, 1, 1], [], []>} : vector<8x16xf32>, vector<16x128xf32>, vector<8x128xf32> -> vector<8x128xf32>
    %4 = vector.broadcast %2 : vector<1x128xf32> to vector<8x128xf32>
    %5 = arith.addf %3, %4 : vector<8x128xf32>
    %cst_4 = arith.constant 0.000000e+00 : f32
    %6 = vector.broadcast %cst_4 : f32 to vector<8x128xf32>
    %7 = arith.maximumf %5, %6 : vector<8x128xf32>
    %c24 = arith.constant 24 : index
    %c0_5 = arith.constant 0 : index
    %8 = vector.load %arg2[%c24, %c0_5] : memref<296x128xf32, #tpu.memory_space<vmem>>, vector<128x128xf32>
    %c152 = arith.constant 152 : index
    %c0_6 = arith.constant 0 : index
    %9 = vector.load %arg2[%c152, %c0_6] : memref<296x128xf32, #tpu.memory_space<vmem>>, vector<1x128xf32>
    %cst_7 = arith.constant dense<0.000000e+00> : vector<8x128xf32>
    %10 = tpu.matmul %7, %8, %cst_7 {dimension_numbers = #tpu.dot_dimension_numbers<[1], [0], [0], [1], [0, 0, 1, 1], [], []>} : vector<8x128xf32>, vector<128x128xf32>, vector<8x128xf32> -> vector<8x128xf32>
    %11 = vector.broadcast %9 : vector<1x128xf32> to vector<8x128xf32>
    %12 = arith.addf %10, %11 : vector<8x128xf32>
    %cst_8 = arith.constant 0.000000e+00 : f32
    %13 = vector.broadcast %cst_8 : f32 to vector<8x128xf32>
    %14 = arith.maximumf %12, %13 : vector<8x128xf32>
    %c160 = arith.constant 160 : index
    %c0_9 = arith.constant 0 : index
    %15 = vector.load %arg2[%c160, %c0_9] : memref<296x128xf32, #tpu.memory_space<vmem>>, vector<128x128xf32>
    %c288 = arith.constant 288 : index
    %c0_10 = arith.constant 0 : index
    %16 = vector.load %arg2[%c288, %c0_10] : memref<296x128xf32, #tpu.memory_space<vmem>>, vector<1x128xf32>
    %cst_11 = arith.constant dense<0.000000e+00> : vector<8x128xf32>
    %17 = tpu.matmul %14, %15, %cst_11 {dimension_numbers = #tpu.dot_dimension_numbers<[1], [0], [0], [1], [0, 0, 1, 1], [], []>} : vector<8x128xf32>, vector<128x128xf32>, vector<8x128xf32> -> vector<8x128xf32>
    %18 = vector.broadcast %16 : vector<1x128xf32> to vector<8x128xf32>
    %19 = arith.addf %17, %18 : vector<8x128xf32>
    %c0_12 = arith.constant 0 : index
    %c0_13 = arith.constant 0 : index
    %20 = vector.load %arg3[%c0_12, %c0_13] : memref<8x128xf32, #tpu.memory_space<vmem>>, vector<8x128xf32>
    tpu.vector_store %arg3[%c0_12, %c0_13], %19 {strides = array<i32>} : memref<8x128xf32, #tpu.memory_space<vmem>>, vector<8x128xf32>,
    return
  }
  func.func @transform_0(%arg0: i32) -> (i32, i32) {
    %c0_i32 = arith.constant 0 : i32
    %c0_i32_0 = arith.constant 0 : i32
    return %arg0, %c0_i32 : i32, i32
  }
  func.func @transform_1(%arg0: i32) -> (i32, i32) {
    %c0_i32 = arith.constant 0 : i32
    %c0_i32_0 = arith.constant 0 : i32
    %c0_i32_1 = arith.constant 0 : i32
    return %c0_i32, %c0_i32_0 : i32, i32
  }
  func.func @transform_2(%arg0: i32) -> (i32, i32) {
    %c0_i32 = arith.constant 0 : i32
    %c0_i32_0 = arith.constant 0 : i32
    return %arg0, %c0_i32 : i32, i32
  }
}

</mosaic_0001>

<llo_original>
// kernel: tpu_custom_call.1
$region0: #{tpu_custom_call.1}
  #allocation0 [shape = 'u32[]', space=smem, size = 0x4, offset = 0x4, fixed_abs, tag = 'smem constant byte address 0x4 - core index']
  #allocation1 [shape = 'u32[144,128]{1,0:T(1,128)}', space=vmem, size = 0x12000, scoped, tag = 'internal scratch']
  %s0 = inlined_call_operand.hbm [shape: f32[8,16], index: 0, kind: input, shape index: {}]
  %s1 = inlined_call_operand.hbm [shape: f32[296,128], index: 1, kind: input, shape index: {}]
  %s2 = inlined_call_operand.hbm [shape: f32[8,128], index: 2, kind: output, shape index: {}]
  %s3 = sld [smem:[#allocation0]]
  $region26: #{tpu_custom_call.1} parent=0
    _
  %s5 = ssub.s32 1, %s3
  %s6 = scalar_select 0, %s5, %s3
  $region1: #{tpu_custom_call.1} parent=0
    #allocation2 [shape = 'u8[4096]{0}', space=vmem, size = 0x1000, scoped, tag = 'input window, operand 0, single buffered']
    #allocation3 [shape = 's32[1]{0}', space=sflag, size = 0x4, scoped, tag = 'scoped memory for tpu_custom_call.1']
    #allocation4 [shape = 's32[1]{0}', space=sflag, size = 0x4, scoped, tag = 'scoped memory for tpu_custom_call.1']
    #allocation5 [shape = 'u8[151552]{0}', space=vmem, size = 0x25000, scoped, tag = 'input window, operand 1, single buffered']
    #allocation6 [shape = 's32[1]{0}', space=sflag, size = 0x4, scoped, tag = 'scoped memory for tpu_custom_call.1']
    #allocation7 [shape = 'u8[4096]{0}', space=vmem, size = 0x1000, scoped, tag = 'output window, operand 0, single buffered']
    %7 = vsyncpa [#allocation3], 0
    %8 = vsyncpa [#allocation6], 0
    %9 = vsyncpa [#allocation4], 0
    // Predicated region
    $region2: #{tpu_custom_call.1} parent=1 // pred_check
      _
    $region3: #{tpu_custom_call.1} parent=1 // pred_check_branch
      %11 = sbr.rel (0) target = $region5
    $region4: #{tpu_custom_call.1} parent=1 // pred_region
      %s13 = ssub.s32 128, 128
      %14 = vsyncadd [#allocation3], %s13
      %s16 = sshll.u32 [#allocation2], 4
      %s17 = int_to_ptr.vmem [resolvable:$true] %s16
      %19 = dma.hbm_to_vmem [thread:$0]  %s0, 128, %s17, [#allocation3]
    $region5: #{tpu_custom_call.1} parent=1 // pred_fallthru
      _
    // Predicated region
    $region6: #{tpu_custom_call.1} parent=1 // pred_check
      _
    $region7: #{tpu_custom_call.1} parent=1 // pred_check_branch
      %21 = sbr.rel (0) target = $region9
    $region8: #{tpu_custom_call.1} parent=1 // pred_region
      %s23 = ssub.s32 4736, 4736
      %24 = vsyncadd [#allocation6], %s23
      %s25 = sshll.u32 [#allocation5], 4
      %s26 = int_to_ptr.vmem [resolvable:$true] %s25
      %31 = dma.hbm_to_vmem [thread:$0]  %s1, 4736, %s26, [#allocation6], 128, 128, 8
    $region9: #{tpu_custom_call.1} parent=1 // pred_fallthru
      _
    // Predicated region
    $region10: #{tpu_custom_call.1} parent=1 // pred_check
      _
    $region11: #{tpu_custom_call.1} parent=1 // pred_check_branch
      %33 = sbr.rel (0) target = $region13
    $region12: #{tpu_custom_call.1} parent=1 // pred_region
      %34 = dma.done [#allocation3], 128
    $region13: #{tpu_custom_call.1} parent=1 // pred_fallthru
      _
    // Predicated region
    $region14: #{tpu_custom_call.1} parent=1 // pred_check
      _
    $region15: #{tpu_custom_call.1} parent=1 // pred_check_branch
      %36 = sbr.rel (0) target = $region17
    $region16: #{tpu_custom_call.1} parent=1 // pred_region
      %37 = dma.done [#allocation6], 4736
    $region17: #{tpu_custom_call.1} parent=1 // pred_fallthru
      _
    %v38 = vld [vmem:[#allocation2] sm:$0xff]
    %v39 = vld [vmem:[#allocation5] sm:$0xff]
    %v40 = vld [vmem:[#allocation5 + $0x8] sm:$0xff]
    %v41 = vld [vmem:[#allocation5 + $0x10] sm:$0x1]
    %v42 = vlaneseq
    %v43 = vshrl.u32 %v42, 7
    %v44 = vsub.s32 0, %v43
    %v45 = vrot.slane %v41, %v44
    %vm46 = vcmask 130048
    %v48 = vsel %vm46, %v38, 0
    %50 = vmatprep.subr.mxu0 0.0
    %51 = vmatpush1.msra.mxu0 %v39
    %52 = vmatprep.subr.mxu0 0.0
    %53 = vmatpush1.msra.mxu0 %v40
    %54 = vmatprep.subr.mxu0 0.0
    %55 = vmatpush1.msra.mxu0 0.0
    %56 = vmatprep.subr.mxu0 0.0
    %57 = vmatpush1.msra.mxu0 0.0
    %58 = vmatprep.subr.mxu0 0.0
    %59 = vmatpush1.msra.mxu0 0.0
    %60 = vmatprep.subr.mxu0 0.0
    %61 = vmatpush1.msra.mxu0 0.0
    %62 = vmatprep.subr.mxu0 0.0
    %63 = vmatpush1.msra.mxu0 0.0
    %64 = vmatprep.subr.mxu0 0.0
    %65 = vmatpush1.msra.mxu0 0.0
    %66 = vmatprep.subr.mxu0 0.0
    %67 = vmatpush1.msra.mxu0 0.0
    %68 = vmatprep.subr.mxu0 0.0
    %69 = vmatpush1.msra.mxu0 0.0
    %70 = vmatprep.subr.mxu0 0.0
    %71 = vmatpush1.msra.mxu0 0.0
    %72 = vmatprep.subr.mxu0 0.0
    %73 = vmatpush1.msra.mxu0 0.0
    %74 = vmatprep.subr.mxu0 0.0
    %75 = vmatpush1.msra.mxu0 0.0
    %76 = vmatprep.subr.mxu0 0.0
    %77 = vmatpush1.msra.mxu0 0.0
    %78 = vmatprep.subr.mxu0 0.0
    %79 = vmatpush1.msra.mxu0 0.0
    %80 = vmatprep.subr.mxu0 0.0
    %81 = vmatpush1.msra.mxu0 0.0
    %82 = vmatprep.subr.mxu0 0.0
    %83 = vmatpush1.msra.mxu0 0.0
    %84 = vmatprep.subr.mxu0 0.0
    %85 = vmatpush1.msra.mxu0 0.0
    %86 = vmatprep.subr.mxu0 0.0
    %87 = vmatpush1.msra.mxu0 0.0
    %88 = vmatprep.subr.mxu0 0.0
    %89 = vmatpush1.msra.mxu0 0.0
    %90 = vmatprep.subr.mxu0 0.0
    %91 = vmatpush1.msra.mxu0 0.0
    %92 = vmatprep.subr.mxu0 0.0
    %93 = vmatpush1.msra.mxu0 0.0
    %94 = vmatprep.subr.mxu0 0.0
    %95 = vmatpush1.msra.mxu0 0.0
    %96 = vmatprep.subr.mxu0 0.0
    %97 = vmatpush1.msra.mxu0 0.0
    %98 = vmatprep.subr.mxu0 0.0
    %99 = vmatpush1.msra.mxu0 0.0
    %100 = vmatprep.subr.mxu0 0.0
    %101 = vmatpush1.msra.mxu0 0.0
    %102 = vmatprep.subr.mxu0 0.0
    %103 = vmatpush1.msra.mxu0 0.0
    %104 = vmatprep.subr.mxu0 0.0
    %105 = vmatpush1.msra.mxu0 0.0
    %106 = vmatprep.subr.mxu0 0.0
    %107 = vmatpush1.msra.mxu0 0.0
    %108 = vmatprep.subr.mxu0 0.0
    %109 = vmatpush1.msra.mxu0 0.0
    %110 = vmatprep.subr.mxu0 0.0
    %111 = vmatpush1.msra.mxu0 0.0
    %112 = vmatprep.subr.mxu0 0.0
    %113 = vmatpush1.msra.mxu0 0.0
    %114 = vmatprep.mubr.f32.mxu0 0.0
    %115 = vmatmul.mubr.f32.gmra.mrb[0].mxu0 %v48
    %v116 = vpop.f32.mrb[0].mxu0
    %v117 = vadd.f32 %v45, %v116
    %v118 = vpop.f32.mrb[0].mxu0
    %119 = vdwg.mxu0
    %v120 = vmax.f32 %v117, 0.0
    %v121 = vld [vmem:[#allocation5 + $0x18] sm:$0xff]
    %v122 = vld [vmem:[#allocation5 + $0x20] sm:$0xff]
    %v123 = vld [vmem:[#allocation5 + $0x28] sm:$0xff]
    %v124 = vld [vmem:[#allocation5 + $0x30] sm:$0xff]
    %v125 = vld [vmem:[#allocation5 + $0x38] sm:$0xff]
    %v126 = vld [vmem:[#allocation5 + $0x40] sm:$0xff]
    %v127 = vld [vmem:[#allocation5 + $0x48] sm:$0xff]
    %v128 = vld [vmem:[#allocation5 + $0x50] sm:$0xff]
    %v129 = vld [vmem:[#allocation5 + $0x58] sm:$0xff]
    %v130 = vld [vmem:[#allocation5 + $0x60] sm:$0xff]
    %v131 = vld [vmem:[#allocation5 + $0x68] sm:$0xff]
    %v132 = vld [vmem:[#allocation5 + $0x70] sm:$0xff]
    %v133 = vld [vmem:[#allocation5 + $0x78] sm:$0xff]
    %v134 = vld [vmem:[#allocation5 + $0x80] sm:$0xff]
    %v135 = vld [vmem:[#allocation5 + $0x88] sm:$0xff]
    %v136 = vld [vmem:[#allocation5 + $0x90] sm:$0xff]
    %v137 = vld [vmem:[#allocation5 + $0x98] sm:$0x1]
    %v138 = vlaneseq
    %v139 = vshrl.u32 %v138, 7
    %v140 = vsub.s32 0, %v139
    %v141 = vrot.slane %v137, %v140
    %142 = vmatprep.subr.mxu0 0.0
    %143 = vmatpush1.msra.mxu0 %v121
    %144 = vmatprep.subr.mxu0 0.0
    %145 = vmatpush1.msra.mxu0 %v122
    %146 = vmatprep.subr.mxu0 0.0
    %147 = vmatpush1.msra.mxu0 %v123
    %148 = vmatprep.subr.mxu0 0.0
    %149 = vmatpush1.msra.mxu0 %v124
    %150 = vmatprep.subr.mxu0 0.0
    %151 = vmatpush1.msra.mxu0 %v125
    %152 = vmatprep.subr.mxu0 0.0
    %153 = vmatpush1.msra.mxu0 %v126
    %154 = vmatprep.subr.mxu0 0.0
    %155 = vmatpush1.msra.mxu0 %v127
    %156 = vmatprep.subr.mxu0 0.0
    %157 = vmatpush1.msra.mxu0 %v128
    %158 = vmatprep.subr.mxu0 0.0
    %159 = vmatpush1.msra.mxu0 %v129
    %160 = vmatprep.subr.mxu0 0.0
    %161 = vmatpush1.msra.mxu0 %v130
    %162 = vmatprep.subr.mxu0 0.0
    %163 = vmatpush1.msra.mxu0 %v131
    %164 = vmatprep.subr.mxu0 0.0
    %165 = vmatpush1.msra.mxu0 %v132
    %166 = vmatprep.subr.mxu0 0.0
    %167 = vmatpush1.msra.mxu0 %v133
    %168 = vmatprep.subr.mxu0 0.0
    %169 = vmatpush1.msra.mxu0 %v134
    %170 = vmatprep.subr.mxu0 0.0
    %171 = vmatpush1.msra.mxu0 %v135
    %172 = vmatprep.subr.mxu0 0.0
    %173 = vmatpush1.msra.mxu0 %v136
    %174 = vmatprep.subr.mxu0 0.0
    %175 = vmatpush1.msra.mxu0 0.0
    %176 = vmatprep.subr.mxu0 0.0
    %177 = vmatpush1.msra.mxu0 0.0
    %178 = vmatprep.subr.mxu0 0.0
    %179 = vmatpush1.msra.mxu0 0.0
    %180 = vmatprep.subr.mxu0 0.0
    %181 = vmatpush1.msra.mxu0 0.0
    %182 = vmatprep.subr.mxu0 0.0
    %183 = vmatpush1.msra.mxu0 0.0
    %184 = vmatprep.subr.mxu0 0.0
    %185 = vmatpush1.msra.mxu0 0.0
    %186 = vmatprep.subr.mxu0 0.0
    %187 = vmatpush1.msra.mxu0 0.0
    %188 = vmatprep.subr.mxu0 0.0
    %189 = vmatpush1.msra.mxu0 0.0
    %190 = vmatprep.subr.mxu0 0.0
    %191 = vmatpush1.msra.mxu0 0.0
    %192 = vmatprep.subr.mxu0 0.0
    %193 = vmatpush1.msra.mxu0 0.0
    %194 = vmatprep.subr.mxu0 0.0
    %195 = vmatpush1.msra.mxu0 0.0
    %196 = vmatprep.subr.mxu0 0.0
    %197 = vmatpush1.msra.mxu0 0.0
    %198 = vmatprep.subr.mxu0 0.0
    %199 = vmatpush1.msra.mxu0 0.0
    %200 = vmatprep.subr.mxu0 0.0
    %201 = vmatpush1.msra.mxu0 0.0
    %202 = vmatprep.subr.mxu0 0.0
    %203 = vmatpush1.msra.mxu0 0.0
    %204 = vmatprep.subr.mxu0 0.0
    %205 = vmatpush1.msra.mxu0 0.0
    %206 = vmatprep.mubr.f32.mxu0 0.0
    %207 = vmatmul.mubr.f32.gmra.mrb[0].mxu0 %v120
    %v208 = vpop.f32.mrb[0].mxu0
    %v209 = vadd.f32 %v141, %v208
    %v210 = vpop.f32.mrb[0].mxu0
    %211 = vdwg.mxu0
    %v212 = vmax.f32 %v209, 0.0
    %v213 = vld [vmem:[#allocation5 + $0xa0] sm:$0xff]
    %v214 = vld [vmem:[#allocation5 + $0xa8] sm:$0xff]
    %v215 = vld [vmem:[#allocation5 + $0xb0] sm:$0xff]
    %v216 = vld [vmem:[#allocation5 + $0xb8] sm:$0xff]
    %v217 = vld [vmem:[#allocation5 + $0xc0] sm:$0xff]
    %v218 = vld [vmem:[#allocation5 + $0xc8] sm:$0xff]
    %v219 = vld [vmem:[#allocation5 + $0xd0] sm:$0xff]
    %v220 = vld [vmem:[#allocation5 + $0xd8] sm:$0xff]
    %v221 = vld [vmem:[#allocation5 + $0xe0] sm:$0xff]
    %v222 = vld [vmem:[#allocation5 + $0xe8] sm:$0xff]
    %v223 = vld [vmem:[#allocation5 + $0xf0] sm:$0xff]
    %v224 = vld [vmem:[#allocation5 + $0xf8] sm:$0xff]
    %v225 = vld [vmem:[#allocation5 + $0x100] sm:$0xff]
    %v226 = vld [vmem:[#allocation5 + $0x108] sm:$0xff]
    %v227 = vld [vmem:[#allocation5 + $0x110] sm:$0xff]
    %v228 = vld [vmem:[#allocation5 + $0x118] sm:$0xff]
    %v229 = vld [vmem:[#allocation5 + $0x120] sm:$0x1]
    %v230 = vlaneseq
    %v231 = vshrl.u32 %v230, 7
    %v232 = vsub.s32 0, %v231
    %v233 = vrot.slane %v229, %v232
    %234 = vmatprep.subr.mxu0 0.0
    %235 = vmatpush1.msra.mxu0 %v213
    %236 = vmatprep.subr.mxu0 0.0
    %237 = vmatpush1.msra.mxu0 %v214
    %238 = vmatprep.subr.mxu0 0.0
    %239 = vmatpush1.msra.mxu0 %v215
    %240 = vmatprep.subr.mxu0 0.0
    %241 = vmatpush1.msra.mxu0 %v216
    %242 = vmatprep.subr.mxu0 0.0
    %243 = vmatpush1.msra.mxu0 %v217
    %244 = vmatprep.subr.mxu0 0.0
    %245 = vmatpush1.msra.mxu0 %v218
    %246 = vmatprep.subr.mxu0 0.0
    %247 = vmatpush1.msra.mxu0 %v219
    %248 = vmatprep.subr.mxu0 0.0
    %249 = vmatpush1.msra.mxu0 %v220
    %250 = vmatprep.subr.mxu0 0.0
    %251 = vmatpush1.msra.mxu0 %v221
    %252 = vmatprep.subr.mxu0 0.0
    %253 = vmatpush1.msra.mxu0 %v222
    %254 = vmatprep.subr.mxu0 0.0
    %255 = vmatpush1.msra.mxu0 %v223
    %256 = vmatprep.subr.mxu0 0.0
    %257 = vmatpush1.msra.mxu0 %v224
    %258 = vmatprep.subr.mxu0 0.0
    %259 = vmatpush1.msra.mxu0 %v225
    %260 = vmatprep.subr.mxu0 0.0
    %261 = vmatpush1.msra.mxu0 %v226
    %262 = vmatprep.subr.mxu0 0.0
    %263 = vmatpush1.msra.mxu0 %v227
    %264 = vmatprep.subr.mxu0 0.0
    %265 = vmatpush1.msra.mxu0 %v228
    %266 = vmatprep.subr.mxu0 0.0
    %267 = vmatpush1.msra.mxu0 0.0
    %268 = vmatprep.subr.mxu0 0.0
    %269 = vmatpush1.msra.mxu0 0.0
    %270 = vmatprep.subr.mxu0 0.0
    %271 = vmatpush1.msra.mxu0 0.0
    %272 = vmatprep.subr.mxu0 0.0
    %273 = vmatpush1.msra.mxu0 0.0
    %274 = vmatprep.subr.mxu0 0.0
    %275 = vmatpush1.msra.mxu0 0.0
    %276 = vmatprep.subr.mxu0 0.0
    %277 = vmatpush1.msra.mxu0 0.0
    %278 = vmatprep.subr.mxu0 0.0
    %279 = vmatpush1.msra.mxu0 0.0
    %280 = vmatprep.subr.mxu0 0.0
    %281 = vmatpush1.msra.mxu0 0.0
    %282 = vmatprep.subr.mxu0 0.0
    %283 = vmatpush1.msra.mxu0 0.0
    %284 = vmatprep.subr.mxu0 0.0
    %285 = vmatpush1.msra.mxu0 0.0
    %286 = vmatprep.subr.mxu0 0.0
    %287 = vmatpush1.msra.mxu0 0.0
    %288 = vmatprep.subr.mxu0 0.0
    %289 = vmatpush1.msra.mxu0 0.0
    %290 = vmatprep.subr.mxu0 0.0
    %291 = vmatpush1.msra.mxu0 0.0
    %292 = vmatprep.subr.mxu0 0.0
    %293 = vmatpush1.msra.mxu0 0.0
    %294 = vmatprep.subr.mxu0 0.0
    %295 = vmatpush1.msra.mxu0 0.0
    %296 = vmatprep.subr.mxu0 0.0
    %297 = vmatpush1.msra.mxu0 0.0
    %298 = vmatprep.mubr.f32.mxu0 0.0
    %299 = vmatmul.mubr.f32.gmra.mrb[0].mxu0 %v212
    %v300 = vpop.f32.mrb[0].mxu0
    %v301 = vadd.f32 %v233, %v300
    %v302 = vpop.f32.mrb[0].mxu0
    %303 = vdwg.mxu0
    %304 = vst [vmem:[#allocation7] sm:$0xff] %v301
    // Predicated region
    $region18: #{tpu_custom_call.1} parent=1 // pred_check
      _
    $region19: #{tpu_custom_call.1} parent=1 // pred_check_branch
      %306 = sbr.rel (0) target = $region21
    $region20: #{tpu_custom_call.1} parent=1 // pred_region
      %s308 = ssub.s32 128, 128
      %309 = vsyncadd [#allocation4], %s308
      %s311 = sshll.u32 [#allocation7], 4
      %s312 = int_to_ptr.vmem [resolvable:$true] %s311
      %314 = dma.vmem_to_hbm [thread:$0]  %s312, 128, %s2, [#allocation4]
    $region21: #{tpu_custom_call.1} parent=1 // pred_fallthru
      _
    // Predicated region
    $region22: #{tpu_custom_call.1} parent=1 // pred_check
      _
    $region23: #{tpu_custom_call.1} parent=1 // pred_check_branch
      %316 = sbr.rel (0) target = $region25
    $region24: #{tpu_custom_call.1} parent=1 // pred_region
      %317 = dma.done [#allocation4], 128
    $region25: #{tpu_custom_call.1} parent=1 // pred_fallthru
      _
    %318 = vsyncpa [#allocation3], 1
    %319 = vsyncpa [#allocation6], 1
    %320 = vsyncpa [#allocation4], 1

</llo_original>
